<compile_context>
chip_gen: v7x
topology: tpu7x:2x2x1
jax: 0.10.0
libtpu: 0.0.40
codegen_flags: <defaults>
</compile_context>

<pallas_src>
import jax
import jax.numpy as jnp
from jax.experimental import pallas as pl
from jax.experimental.pallas import tpu as pltpu


def _round_up(x: int, m: int) -> int:
    return ((x + m - 1) // m) * m


def _bilinear_kernel(x_i_ref, x_j_ref, w_ref, o_ref, v_ref):
    """One grid step (b, i, j).

    x_i_ref: (1, ti, D)  x rows for the output row-tile i
    x_j_ref: (1, tj, D)  x rows for the output col-tile j
    w_ref:   (D, D)      full weight (constant index_map -> resident)
    o_ref:   (1, ti, tj) output tile
    v_ref:   (ti, D)     VMEM scratch: v_i = x_i @ W, computed once per i
    """
    j = pl.program_id(2)

    @pl.when(j == 0)
    def _():
        # v_i[t, d] = sum_e x_i[t, e] * W[e, d]
        # (plain contraction, no transpose needed; consumed as out = v_i . x_j)
        v = jax.lax.dot_general(
            x_i_ref[0], w_ref[...],
            dimension_numbers=(((1,), (0,)), ((), ())),
            preferred_element_type=jnp.float32)
        v_ref[...] = v.astype(v_ref.dtype)

    # out_tile[t, u] = sum_d v_i[t, d] * x_j[u, d]
    # Transposed-B contraction folded into dot_general dims: MXU only, no XLU.
    out = jax.lax.dot_general(
        v_ref[...], x_j_ref[0],
        dimension_numbers=(((1,), (1,)), ((), ())),
        preferred_element_type=jnp.float32)
    o_ref[0] = out.astype(o_ref.dtype)


def bilinear_self_align(x: jax.Array, w: jax.Array,
                        compute_dtype=jnp.bfloat16) -> jax.Array:
    """x: (B, S, D), w: (D, D)  ->  (B, S, S) in x.dtype."""
    B, S, D = x.shape
    assert w.shape == (D, D)
    out_dtype = x.dtype

    # MXU-friendly tiles: 256-aligned for large S (v6e/v7x native systolic
    # width), 128 otherwise (v5e MXU width / lane count). Lane-dense output.
    tile = 256 if S >= 256 else 128
    S_pad = _round_up(S, tile)
    D_pad = _round_up(D, 128)
    ti = tj = tile
    ni = S_pad // ti
    nj = S_pad // tj

    xc = x.astype(compute_dtype)
    wc = w.astype(compute_dtype)
    if (S_pad, D_pad) != (S, D):
        xc = jnp.pad(xc, ((0, 0), (0, S_pad - S), (0, D_pad - D)))
        wc = jnp.pad(wc, ((0, D_pad - D), (0, D_pad - D)))

    in_size = jnp.dtype(compute_dtype).itemsize
    out_size = jnp.dtype(out_dtype).itemsize

    # Rough per-step VMEM: double-buffered x_i/x_j/out tiles + 2x resident W
    # + v scratch. Raise the scoped limit if needed, cap well under v7x's
    # 64 MiB physical VMEM.
    vmem_est = (2 * (2 * ti * D_pad * in_size + ti * tj * out_size)
                + 2 * D_pad * D_pad * in_size
                + ti * D_pad * in_size)
    vmem_limit = int(min(max(2 * vmem_est, 32 * 1024 * 1024),
                         100 * 1024 * 1024))

    flops = 2 * B * (S * D * D + S * S * D)
    bytes_accessed = (B * S * D + D * D) * in_size + B * S * S * out_size

    grid_spec = pltpu.PrefetchScalarGridSpec(
        num_scalar_prefetch=0,
        grid=(B, ni, nj),
        in_specs=[
            pl.BlockSpec((1, ti, D_pad), lambda b, i, j: (b, i, 0)),  # x (i tile)
            pl.BlockSpec((1, tj, D_pad), lambda b, i, j: (b, j, 0)),  # x (j tile)
            pl.BlockSpec((D_pad, D_pad), lambda b, i, j: (0, 0)),     # W, resident
        ],
        out_specs=pl.BlockSpec((1, ti, tj), lambda b, i, j: (b, i, j)),
        scratch_shapes=[pltpu.VMEM((ti, D_pad), compute_dtype)],
    )

    out_padded = pl.pallas_call(
        _bilinear_kernel,
        out_shape=jax.ShapeDtypeStruct((B, S_pad, S_pad), out_dtype),
        grid_spec=grid_spec,
        compiler_params=pltpu.CompilerParams(
            # j must stay "arbitrary": the once-per-i v scratch is reused
            # across the j axis.
            dimension_semantics=("parallel", "parallel", "arbitrary"),
            vmem_limit_bytes=vmem_limit,
        ),
        cost_estimate=pl.CostEstimate(
            flops=flops, transcendentals=0, bytes_accessed=bytes_accessed),
    )(xc, xc, wc)

    if S_pad != S:
        out_padded = out_padded[:, :S, :S]
    return out_padded


def _reference(x, w):
    # Pure-JAX reference mirroring the PyTorch forward (f32).
    wx = jnp.einsum("bsd,ed->bse", x, w)      # x @ W^T
    return jnp.einsum("bid,bjd->bij", x, wx)  # bmm(x, Wx^T)


if __name__ == "__main__":
    B, S, D = 2, 8, 32

    key = jax.random.PRNGKey(0)
    kx, kw = jax.random.split(key)
    x = jax.random.normal(kx, (B, S, D), dtype=jnp.float32)
    # Deterministic init mimicking nn.Linear's uniform(-1/sqrt(D), 1/sqrt(D)).
    bound = 1.0 / jnp.sqrt(jnp.float32(D))
    w = jax.random.uniform(kw, (D, D), dtype=jnp.float32,
                           minval=-bound, maxval=bound)

    ref = _reference(x, w)

    # Exact path (f32 MXU operands): tight tolerance.
    out_f32 = jax.block_until_ready(
        bilinear_self_align(x, w, compute_dtype=jnp.float32))
    assert out_f32.shape == (B, S, S)
    assert jnp.allclose(out_f32, ref, atol=1e-4, rtol=1e-4), "f32 kernel mismatch"

    # Fast path (bf16 MXU operands, f32 accumulation): looser tolerance.
    out_bf16 = jax.block_until_ready(
        bilinear_self_align(x, w, compute_dtype=jnp.bfloat16))
    assert out_bf16.shape == (B, S, S)
    assert jnp.allclose(out_bf16, ref, atol=3e-1, rtol=3e-2), "bf16 kernel mismatch"

    print("KERNEL_OK")
</pallas_src>

<mosaic_0001>
module attributes {stable_mosaic.version = 11 : i64} {
  func.func @_bilinear_kernel(%arg0: i32, %arg1: i32, %arg2: i32, %arg3: memref<1x128x128xf32, #tpu.memory_space<vmem>>, %arg4: memref<1x128x128xf32, #tpu.memory_space<vmem>>, %arg5: memref<128x128xf32, #tpu.memory_space<vmem>>, %arg6: memref<1x128x128xf32, #tpu.memory_space<vmem>>, %arg7: memref<128x128xf32, #tpu.memory_space<vmem>>) attributes {dimension_semantics = [#tpu.dimension_semantics<parallel>, #tpu.dimension_semantics<parallel>, #tpu.dimension_semantics<arbitrary>], iteration_bounds = array<i64: 2, 1, 1>, scalar_prefetch = 0 : i64, scratch_operands = 1 : i64, tpu.core_type = #tpu.core_type<tc>, window_params = [{transform_indices = @transform_0, window_bounds = array<i64: 1, 128, 128>}, {transform_indices = @transform_1, window_bounds = array<i64: 1, 128, 128>}, {pipeline_mode = #tpu.pipeline_mode<synchronous>, transform_indices = @transform_2, window_bounds = array<i64: 128, 128>}, {transform_indices = @transform_3, window_bounds = array<i64: 1, 128, 128>}]} {
    %c0_i32 = arith.constant 0 : i32
    %0 = arith.cmpi eq, %arg2, %c0_i32 : i32
    %1 = arith.extui %0 : i1 to i32
    %c0_i32_0 = arith.constant 0 : i32
    %2 = arith.cmpi ne, %1, %c0_i32_0 : i32
    scf.if %2 {
      %c0_8 = arith.constant 0 : index
      %c0_9 = arith.constant 0 : index
      %c0_10 = arith.constant 0 : index
      %10 = vector.load %arg3[%c0_8, %c0_9, %c0_10] : memref<1x128x128xf32, #tpu.memory_space<vmem>>, vector<1x128x128xf32>
      %11 = vector.shape_cast %10 : vector<1x128x128xf32> to vector<128x128xf32>
      %c0_11 = arith.constant 0 : index
      %c0_12 = arith.constant 0 : index
      %12 = vector.load %arg5[%c0_11, %c0_12] : memref<128x128xf32, #tpu.memory_space<vmem>>, vector<128x128xf32>
      %cst_13 = arith.constant dense<0.000000e+00> : vector<128x128xf32>
      %13 = tpu.matmul %11, %12, %cst_13 {dimension_numbers = #tpu.dot_dimension_numbers<[1], [0], [0], [1], [0, 0, 1, 1], [], []>} : vector<128x128xf32>, vector<128x128xf32>, vector<128x128xf32> -> vector<128x128xf32>
      %c0_14 = arith.constant 0 : index
      %c0_15 = arith.constant 0 : index
      %14 = vector.load %arg7[%c0_14, %c0_15] : memref<128x128xf32, #tpu.memory_space<vmem>>, vector<128x128xf32>
      tpu.vector_store %arg7[%c0_14, %c0_15], %13 {strides = array<i32>} : memref<128x128xf32, #tpu.memory_space<vmem>>, vector<128x128xf32>,
    } else {
    }
    %c0 = arith.constant 0 : index
    %c0_1 = arith.constant 0 : index
    %3 = vector.load %arg7[%c0, %c0_1] : memref<128x128xf32, #tpu.memory_space<vmem>>, vector<128x128xf32>
    %c0_2 = arith.constant 0 : index
    %c0_3 = arith.constant 0 : index
    %c0_4 = arith.constant 0 : index
    %4 = vector.load %arg4[%c0_2, %c0_3, %c0_4] : memref<1x128x128xf32, #tpu.memory_space<vmem>>, vector<1x128x128xf32>
    %5 = vector.shape_cast %4 : vector<1x128x128xf32> to vector<128x128xf32>
    %cst = arith.constant dense<0.000000e+00> : vector<128x128xf32>
    %6 = tpu.matmul %3, %5, %cst {dimension_numbers = #tpu.dot_dimension_numbers<[1], [1], [0], [0], [0, 0, 1, 0], [], []>} : vector<128x128xf32>, vector<128x128xf32>, vector<128x128xf32> -> vector<128x128xf32>
    %c0_5 = arith.constant 0 : index
    %c0_6 = arith.constant 0 : index
    %c0_7 = arith.constant 0 : index
    %7 = vector.load %arg6[%c0_5, %c0_6, %c0_7] : memref<1x128x128xf32, #tpu.memory_space<vmem>>, vector<1x128x128xf32>
    %8 = vector.shape_cast %7 : vector<1x128x128xf32> to vector<128x128xf32>
    %9 = vector.shape_cast %6 : vector<128x128xf32> to vector<1x128x128xf32>
    tpu.vector_store %arg6[%c0_5, %c0_6, %c0_7], %9 {strides = array<i32>} : memref<1x128x128xf32, #tpu.memory_space<vmem>>, vector<1x128x128xf32>,
    return
  }
  func.func @transform_0(%arg0: i32, %arg1: i32, %arg2: i32) -> (i32, i32, i32) {
    %c0_i32 = arith.constant 0 : i32
    %c0_i32_0 = arith.constant 0 : i32
    return %arg0, %arg1, %c0_i32 : i32, i32, i32
  }
  func.func @transform_1(%arg0: i32, %arg1: i32, %arg2: i32) -> (i32, i32, i32) {
    %c0_i32 = arith.constant 0 : i32
    %c0_i32_0 = arith.constant 0 : i32
    return %arg0, %arg2, %c0_i32 : i32, i32, i32
  }
  func.func @transform_2(%arg0: i32, %arg1: i32, %arg2: i32) -> (i32, i32) {
    %c0_i32 = arith.constant 0 : i32
    %c0_i32_0 = arith.constant 0 : i32
    %c0_i32_1 = arith.constant 0 : i32
    return %c0_i32, %c0_i32_0 : i32, i32
  }
  func.func @transform_3(%arg0: i32, %arg1: i32, %arg2: i32) -> (i32, i32, i32) {
    %c0_i32 = arith.constant 0 : i32
    return %arg0, %arg1, %arg2 : i32, i32, i32
  }
}

</mosaic_0001>

<llo_original>
// kernel: tpu_custom_call.1
$region0: #{tpu_custom_call.1}
  #allocation0 [shape = 'u32[]', space=smem, size = 0x4, offset = 0x4, fixed_abs, tag = 'smem constant byte address 0x4 - core index']
  #allocation1 [shape = 'u32[144,128]{1,0:T(1,128)}', space=vmem, size = 0x12000, scoped, tag = 'internal scratch']
  #allocation2 [shape = 'f32[128,128]{1,0:T(8,128)}', space=vmem, size = 0x10000, scoped, tag = 'scratch operand']
  %s0 = inlined_call_operand.hbm [shape: f32[2,128,128], index: 0, kind: input, shape index: {}]
  %s1 = inlined_call_operand.hbm [shape: f32[2,128,128], index: 1, kind: input, shape index: {}]
  %s2 = inlined_call_operand.hbm [shape: f32[128,128], index: 2, kind: input, shape index: {}]
  %s3 = inlined_call_operand.hbm [shape: f32[2,128,128], index: 3, kind: output, shape index: {}]
  %s4 = sld [smem:[#allocation0]]
  $region61: #{tpu_custom_call.1} parent=0
    _
  %s6 = ssub.s32 1, %s4
  %s7 = scalar_select 0, %s6, %s4
  $region1: #{tpu_custom_call.1} parent=0
    #allocation3 [shape = 'u8[131072]{0}', space=vmem, size = 0x20000, scoped, tag = 'input window, operand 0']
    #allocation4 [shape = 's32[2]{0}', space=sflag, size = 0x8, scoped, tag = 'scoped memory for tpu_custom_call.1']
    #allocation5 [shape = 's32[2]{0}', space=sflag, size = 0x8, scoped, tag = 'scoped memory for tpu_custom_call.1']
    #allocation6 [shape = 'u8[131072]{0}', space=vmem, size = 0x20000, scoped, tag = 'input window, operand 1']
    #allocation7 [shape = 's32[2]{0}', space=sflag, size = 0x8, scoped, tag = 'scoped memory for tpu_custom_call.1']
    #allocation8 [shape = 'u8[65536]{0}', space=vmem, size = 0x10000, scoped, tag = 'input window, operand 2, single buffered']
    #allocation9 [shape = 'u8[131072]{0}', space=vmem, size = 0x20000, scoped, tag = 'output window, operand 0']
    %8 = vsyncpa [#allocation4], 0
    %s9 = scalar_lea.sflag [#allocation4], 1
    %10 = vsyncpa %s9, 0
    %11 = vsyncpa [#allocation7], 0
    %s12 = scalar_lea.sflag [#allocation7], 1
    %13 = vsyncpa %s12, 0
    %14 = vsyncpa [#allocation5], 0
    %s15 = scalar_lea.sflag [#allocation5], 1
    %16 = vsyncpa %s15, 0
    loop: start=0, step=1, limit=4
    $region2: #{tpu_custom_call.1} parent=1 // loop_pre_header
      _
    $region3: #{tpu_custom_call.1} parent=1 // loop_header
      %s18 = sphi 0, %s22
      %p19 = scmp.ge.s32.totalorder %s18, 4
      %s25 = sphi 0, %s44
      %s26 = sphi 0, %s40
      %s27 = sphi 0, %s36
      %s28 = sphi 0, %s25
      %s29 = sphi 0, %s26
      %s30 = sphi 0, %s27
      %s31 = sphi 0, %s28
      %s32 = sphi 0, %s29
      %s33 = sphi 0, %s30
      %s49 = sphi 0, %s51
      %s52 = sphi 0, %s49
      %s53 = sphi 0, %s52
      %s69 = sphi 0, %s53
      %s77 = sphi 0, %s79
      %s80 = sphi 0, %s77
      %s81 = sphi 0, %s80
      %s97 = sphi 0, %s81
      %s101 = sphi 0, %s101
      %s103 = sphi 0, %s101
      %s104 = sphi 0, %s103
      %s118 = sphi 0, %s104
      %s128 = sphi 0, %s130
      %s131 = sphi 0, %s128
      %s132 = sphi 0, %s131
      %s148 = sphi 0, %s132
    $region4: #{tpu_custom_call.1} parent=1 // loop_header_branch
      %21 = sbr.rel (%p19) target = $region8
    $region5: #{tpu_custom_call.1} parent=1 // loop_body
      %s23 = ssub.s32 %s18, 1
      %s24 = ssub.s32 %s18, 2
      %s34 = sadd.s32 1, %s27
      %p35 = scmp.ge.s32.totalorder %s34, 1
      %s36 = scalar_select %p35, 0, %s34
      %s37 = sadd.s32 1, %s26
      %s38 = scalar_select %p35, %s37, %s26
      %p39 = scmp.ge.s32.totalorder %s38, 1
      %s40 = scalar_select %p39, 0, %s38
      %s41 = sadd.s32 1, %s25
      %s42 = scalar_select %p39, %s41, %s25
      %p43 = scmp.ge.s32.totalorder %s42, 2
      %s44 = scalar_select %p43, 0, %s42
      %s45 = ssub.s32 %s25, %s44
      %s46 = ssub.s32 %s26, %s40
      %s47 = sor.u32 %s45, %s46
      %p48 = scmp.eq.s32.totalorder %s47, 0
      %s50 = sadd.s32 %s49, 1
      %s51 = scalar_select %p48, %s49, %s50
      %p54 = pneg %p48
      %p55 = scmp.eq.s32.totalorder %s18, 1
      %p56 = por %p54, %p55
      %p57 = scmp.ne.s32.totalorder %s49, %s52
      %p58 = scmp.eq.s32.totalorder %s18, 0
      %p59 = por %p57, %p58
      %p60 = scmp.ne.s32.totalorder %s49, %s52
      %p61 = scmp.eq.s32.totalorder %s23, 1
      %p62 = por %p60, %p61
      %p63 = scmp.ne.s32.totalorder %s52, %s53
      %p64 = scmp.eq.s32.totalorder %s23, 0
      %p65 = por %p63, %p64
      %p66 = scmp.ne.s32.totalorder %s52, %s53
      %p67 = scmp.eq.s32.totalorder %s24, 1
      %p68 = por %p66, %p67
      %p70 = scmp.ne.s32.totalorder %s53, %s69
      %p71 = scmp.eq.s32.totalorder %s24, 0
      %p72 = por %p70, %p71
      %s73 = ssub.s32 %s25, %s44
      %s74 = ssub.s32 %s27, %s36
      %s75 = sor.u32 %s73, %s74
      %p76 = scmp.eq.s32.totalorder %s75, 0
      %s78 = sadd.s32 %s77, 1
      %s79 = scalar_select %p76, %s77, %s78
      %p82 = pneg %p76
      %p83 = scmp.eq.s32.totalorder %s18, 1
      %p84 = por %p82, %p83
      %p85 = scmp.ne.s32.totalorder %s77, %s80
      %p86 = scmp.eq.s32.totalorder %s18, 0
      %p87 = por %p85, %p86
      %p88 = scmp.ne.s32.totalorder %s77, %s80
      %p89 = scmp.eq.s32.totalorder %s23, 1
      %p90 = por %p88, %p89
      %p91 = scmp.ne.s32.totalorder %s80, %s81
      %p92 = scmp.eq.s32.totalorder %s23, 0
      %p93 = por %p91, %p92
      %p94 = scmp.ne.s32.totalorder %s80, %s81
      %p95 = scmp.eq.s32.totalorder %s24, 1
      %p96 = por %p94, %p95
      %p98 = scmp.ne.s32.totalorder %s81, %s97
      %p99 = scmp.eq.s32.totalorder %s24, 0
      %p100 = por %p98, %p99
      %s102 = sadd.s32 %s101, 1
      %p105 = scmp.eq.s32.totalorder %s18, 1
      %p106 = scmp.ne.s32.totalorder %s101, %s103
      %p107 = scmp.eq.s32.totalorder %s18, 0
      %p108 = por %p106, %p107
      %p109 = scmp.ne.s32.totalorder %s101, %s103
      %p110 = scmp.eq.s32.totalorder %s23, 1
      %p111 = por %p109, %p110
      %p112 = scmp.ne.s32.totalorder %s103, %s104
      %p113 = scmp.eq.s32.totalorder %s23, 0
      %p114 = por %p112, %p113
      %p115 = scmp.ne.s32.totalorder %s103, %s104
      %p116 = scmp.eq.s32.totalorder %s24, 1
      %p117 = por %p115, %p116
      %p119 = scmp.ne.s32.totalorder %s104, %s118
      %p120 = scmp.eq.s32.totalorder %s24, 0
      %p121 = por %p119, %p120
      %s122 = ssub.s32 %s25, %s44
      %s123 = ssub.s32 %s26, %s40
      %s124 = sor.u32 %s122, %s123
      %s125 = ssub.s32 %s27, %s36
      %s126 = sor.u32 %s124, %s125
      %p127 = scmp.eq.s32.totalorder %s126, 0
      %s129 = sadd.s32 %s128, 1
      %s130 = scalar_select %p127, %s128, %s129
      %p133 = pneg %p127
      %p134 = scmp.eq.s32.totalorder %s18, 1
      %p135 = por %p133, %p134
      %p136 = scmp.ne.s32.totalorder %s128, %s131
      %p137 = scmp.eq.s32.totalorder %s18, 0
      %p138 = por %p136, %p137
      %p139 = scmp.ne.s32.totalorder %s128, %s131
      %p140 = scmp.eq.s32.totalorder %s23, 1
      %p141 = por %p139, %p140
      %p142 = scmp.ne.s32.totalorder %s131, %s132
      %p143 = scmp.eq.s32.totalorder %s23, 0
      %p144 = por %p142, %p143
      %p145 = scmp.ne.s32.totalorder %s131, %s132
      %p146 = scmp.eq.s32.totalorder %s24, 1
      %p147 = por %p145, %p146
      %p149 = scmp.ne.s32.totalorder %s132, %s148
      %p150 = scmp.eq.s32.totalorder %s24, 0
      %p151 = por %p149, %p150
      %p152 = scmp.le.s32.totalorder 1, %s18
      %p153 = scmp.lt.s32.totalorder %s18, 3
      %p154 = pnand %p152, %p153
      %p155 = pneg %p154
      // Predicated region
      $region9: #{tpu_custom_call.1} parent=5 // pred_check
        _
      $region10: #{tpu_custom_call.1} parent=5 // pred_check_branch
        %157 = sbr.rel (%p154) target = $region12
      $region11: #{tpu_custom_call.1} parent=5 // pred_region
        %s158 = ssub.s32 %s18, 1
        // Predicated region
        $region13: #{tpu_custom_call.1} parent=11 // pred_check
          %p159 = pneg %p114
        $region14: #{tpu_custom_call.1} parent=11 // pred_check_branch
          %161 = sbr.rel (%p159) target = $region16
        $region15: #{tpu_custom_call.1} parent=11 // pred_region
          %s163 = ssub.s32 2048, 2048
          %164 = vsyncadd [#allocation7], %s163
          %s165 = sshll.u32 [#allocation8], 4
          %s166 = int_to_ptr.vmem [resolvable:$true] %s165
          %171 = dma.hbm_to_vmem [thread:$0]  %s2, 2048, %s166, [#allocation7], 128, 128, 8
        $region16: #{tpu_custom_call.1} parent=11 // pred_fallthru
          _
      $region12: #{tpu_custom_call.1} parent=5 // pred_fallthru
        _
      %p172 = scmp.lt.s32.totalorder %s18, 2
      // Predicated region
      $region17: #{tpu_custom_call.1} parent=5 // pred_check
        %p173 = pneg %p172
      $region18: #{tpu_custom_call.1} parent=5 // pred_check_branch
        %175 = sbr.rel (%p173) target = $region20
      $region19: #{tpu_custom_call.1} parent=5 // pred_region
        // Predicated region
        $region21: #{tpu_custom_call.1} parent=19 // pred_check
          %p176 = pneg %p59
        $region22: #{tpu_custom_call.1} parent=19 // pred_check_branch
          %178 = sbr.rel (%p176) target = $region24
        $region23: #{tpu_custom_call.1} parent=19 // pred_region
          %s179 = sand.u32 %s49, 1
          %s180 = scalar_lea.sflag [#allocation4], %s179
          %s181 = sand.u32 %s49, 1
          %s182 = smul.addr %s181, 128
          %s183 = scalar_lea.vmem [#allocation3], %s182
          %s184 = smul.u32 16, %s26
          %s186 = ssub.s32 2048, 2048
          %187 = vsyncadd %s180, %s186
          %s188 = smul.addr %s25, 16
          %s189 = sadd.s32 %s184, %s188
          %s190 = smul.addr %s189, 128
          %s191 = scalar_lea.hbm %s0, %s190
          %s192 = sshll.u32 %s183, 4
          %s193 = int_to_ptr.vmem [resolvable:$true] %s192
          %198 = dma.hbm_to_vmem [thread:$0]  %s191, 2048, %s193, %s180, 128, 128, 8
        $region24: #{tpu_custom_call.1} parent=19 // pred_fallthru
          _
        // Predicated region
        $region25: #{tpu_custom_call.1} parent=19 // pred_check
          %p199 = pneg %p87
        $region26: #{tpu_custom_call.1} parent=19 // pred_check_branch
          %201 = sbr.rel (%p199) target = $region28
        $region27: #{tpu_custom_call.1} parent=19 // pred_region
          %s202 = sand.u32 %s18, 1
          %s203 = scalar_lea.sflag [#allocation7], %s202
          %s204 = sand.u32 %s77, 1
          %s205 = smul.addr %s204, 128
          %s206 = scalar_lea.vmem [#allocation6], %s205
          %s207 = smul.u32 16, %s27
          %s209 = ssub.s32 2048, 2048
          %210 = vsyncadd %s203, %s209
          %s211 = smul.addr %s25, 16
          %s212 = sadd.s32 %s207, %s211
          %s213 = smul.addr %s212, 128
          %s214 = scalar_lea.hbm %s1, %s213
          %s215 = sshll.u32 %s206, 4
          %s216 = int_to_ptr.vmem [resolvable:$true] %s215
          %221 = dma.hbm_to_vmem [thread:$0]  %s214, 2048, %s216, %s203, 128, 128, 8
        $region28: #{tpu_custom_call.1} parent=19 // pred_fallthru
          _
      $region20: #{tpu_custom_call.1} parent=5 // pred_fallthru
        _
      %p222 = scmp.le.s32.totalorder 1, %s18
      %p223 = scmp.lt.s32.totalorder %s18, 3
      %p224 = pnand %p222, %p223
      %p225 = pneg %p224
      // Predicated region
      $region29: #{tpu_custom_call.1} parent=5 // pred_check
        _
      $region30: #{tpu_custom_call.1} parent=5 // pred_check_branch
        %227 = sbr.rel (%p224) target = $region32
      $region31: #{tpu_custom_call.1} parent=5 // pred_region
        %s228 = ssub.s32 %s18, 1
        %s229 = sand.u32 %s52, 1
        %s230 = scalar_lea.sflag [#allocation4], %s229
        %s231 = sand.u32 %s52, 1
        %s232 = smul.addr %s231, 128
        %s233 = scalar_lea.vmem [#allocation3], %s232
        // Predicated region
        $region33: #{tpu_custom_call.1} parent=31 // pred_check
          %p234 = pneg %p65
        $region34: #{tpu_custom_call.1} parent=31 // pred_check_branch
          %236 = sbr.rel (%p234) target = $region36
        $region35: #{tpu_custom_call.1} parent=31 // pred_region
          %237 = dma.done %s230, 2048
        $region36: #{tpu_custom_call.1} parent=31 // pred_fallthru
          _
        %s238 = sand.u32 %s23, 1
        %s239 = scalar_lea.sflag [#allocation7], %s238
        %s240 = sand.u32 %s80, 1
        %s241 = smul.addr %s240, 128
        %s242 = scalar_lea.vmem [#allocation6], %s241
        // Predicated region
        $region37: #{tpu_custom_call.1} parent=31 // pred_check
          %p243 = pneg %p93
        $region38: #{tpu_custom_call.1} parent=31 // pred_check_branch
          %245 = sbr.rel (%p243) target = $region40
        $region39: #{tpu_custom_call.1} parent=31 // pred_region
          %246 = dma.done %s239, 2048
        $region40: #{tpu_custom_call.1} parent=31 // pred_fallthru
          _
        // Predicated region
        $region41: #{tpu_custom_call.1} parent=31 // pred_check
          %p247 = pneg %p114
        $region42: #{tpu_custom_call.1} parent=31 // pred_check_branch
          %249 = sbr.rel (%p247) target = $region44
        $region43: #{tpu_custom_call.1} parent=31 // pred_region
          %250 = dma.done [#allocation7], 2048
        $region44: #{tpu_custom_call.1} parent=31 // pred_fallthru
          _
        %s251 = sand.u32 %s52, 1
        %s252 = scalar_lea.sflag [#allocation4], %s251
        %s253 = sand.u32 %s52, 1
        %s254 = smul.addr %s253, 128
        %s255 = scalar_lea.vmem [#allocation3], %s254
        %p256 = pneg %p65
        %p257 = pneg %p62
        %s258 = sand.u32 %s23, 1
        %s259 = scalar_lea.sflag [#allocation7], %s258
        %s260 = sand.u32 %s80, 1
        %s261 = smul.addr %s260, 128
        %s262 = scalar_lea.vmem [#allocation6], %s261
        %p263 = pneg %p93
        %p264 = pneg %p90
        %p265 = pneg %p114
        %p266 = pneg %p111
        %p267 = pneg %p144
        %p268 = pneg %p141
        %s269 = sand.u32 %s131, 1
        %s270 = scalar_lea.sflag [#allocation5], %s269
        %s271 = sand.u32 %s131, 1
        %s272 = smul.addr %s271, 128
        %s273 = scalar_lea.vmem [#allocation9], %s272
        %s274 = smul.u32 16, %s29
        %s275 = smul.u32 16, %s30
        %s276 = smul.u32 16, %s29
        %p277 = scmp.eq.s32.totalorder %s30, 0
        // Predicated region
        $region45: #{tpu_custom_call.1} parent=31 // pred_check
          %p278 = pneg %p277
        $region46: #{tpu_custom_call.1} parent=31 // pred_check_branch
          %280 = sbr.rel (%p278) target = $region48
        $region47: #{tpu_custom_call.1} parent=31 // pred_region
          %v281 = vld [vmem:[%s233] sm:$0xff]
          %v282 = vld [vmem:[%s233 + $0x8] sm:$0xff]
          %v283 = vld [vmem:[%s233 + $0x10] sm:$0xff]
          %v284 = vld [vmem:[%s233 + $0x18] sm:$0xff]
          %v285 = vld [vmem:[%s233 + $0x20] sm:$0xff]
          %v286 = vld [vmem:[%s233 + $0x28] sm:$0xff]
          %v287 = vld [vmem:[%s233 + $0x30] sm:$0xff]
          %v288 = vld [vmem:[%s233 + $0x38] sm:$0xff]
          %v289 = vld [vmem:[%s233 + $0x40] sm:$0xff]
          %v290 = vld [vmem:[%s233 + $0x48] sm:$0xff]
          %v291 = vld [vmem:[%s233 + $0x50] sm:$0xff]
          %v292 = vld [vmem:[%s233 + $0x58] sm:$0xff]
          %v293 = vld [vmem:[%s233 + $0x60] sm:$0xff]
          %v294 = vld [vmem:[%s233 + $0x68] sm:$0xff]
          %v295 = vld [vmem:[%s233 + $0x70] sm:$0xff]
          %v296 = vld [vmem:[%s233 + $0x78] sm:$0xff]
          %v297 = vld [vmem:[#allocation8] sm:$0xff]
          %v298 = vld [vmem:[#allocation8 + $0x8] sm:$0xff]
          %v299 = vld [vmem:[#allocation8 + $0x10] sm:$0xff]
          %v300 = vld [vmem:[#allocation8 + $0x18] sm:$0xff]
          %v301 = vld [vmem:[#allocation8 + $0x20] sm:$0xff]
          %v302 = vld [vmem:[#allocation8 + $0x28] sm:$0xff]
          %v303 = vld [vmem:[#allocation8 + $0x30] sm:$0xff]
          %v304 = vld [vmem:[#allocation8 + $0x38] sm:$0xff]
          %v305 = vld [vmem:[#allocation8 + $0x40] sm:$0xff]
          %v306 = vld [vmem:[#allocation8 + $0x48] sm:$0xff]
          %v307 = vld [vmem:[#allocation8 + $0x50] sm:$0xff]
          %v308 = vld [vmem:[#allocation8 + $0x58] sm:$0xff]
          %v309 = vld [vmem:[#allocation8 + $0x60] sm:$0xff]
          %v310 = vld [vmem:[#allocation8 + $0x68] sm:$0xff]
          %v311 = vld [vmem:[#allocation8 + $0x70] sm:$0xff]
          %v312 = vld [vmem:[#allocation8 + $0x78] sm:$0xff]
          %313 = vmatprep.subr.mxu0 0.0
          %314 = vmatpush1.msra.mxu0 %v297
          %315 = vmatprep.subr.mxu0 0.0
          %316 = vmatpush1.msra.mxu0 %v298
          %317 = vmatprep.subr.mxu0 0.0
          %318 = vmatpush1.msra.mxu0 %v299
          %319 = vmatprep.subr.mxu0 0.0
          %320 = vmatpush1.msra.mxu0 %v300
          %321 = vmatprep.subr.mxu0 0.0
          %322 = vmatpush1.msra.mxu0 %v301
          %323 = vmatprep.subr.mxu0 0.0
          %324 = vmatpush1.msra.mxu0 %v302
          %325 = vmatprep.subr.mxu0 0.0
          %326 = vmatpush1.msra.mxu0 %v303
          %327 = vmatprep.subr.mxu0 0.0
          %328 = vmatpush1.msra.mxu0 %v304
          %329 = vmatprep.subr.mxu0 0.0
          %330 = vmatpush1.msra.mxu0 %v305
          %331 = vmatprep.subr.mxu0 0.0
          %332 = vmatpush1.msra.mxu0 %v306
          %333 = vmatprep.subr.mxu0 0.0
          %334 = vmatpush1.msra.mxu0 %v307
          %335 = vmatprep.subr.mxu0 0.0
          %336 = vmatpush1.msra.mxu0 %v308
          %337 = vmatprep.subr.mxu0 0.0
          %338 = vmatpush1.msra.mxu0 %v309
          %339 = vmatprep.subr.mxu0 0.0
          %340 = vmatpush1.msra.mxu0 %v310
          %341 = vmatprep.subr.mxu0 0.0
          %342 = vmatpush1.msra.mxu0 %v311
          %343 = vmatprep.subr.mxu0 0.0
          %344 = vmatpush1.msra.mxu0 %v312
          %345 = vmatprep.subr.mxu0 0.0
          %346 = vmatpush1.msra.mxu0 0.0
          %347 = vmatprep.subr.mxu0 0.0
          %348 = vmatpush1.msra.mxu0 0.0
          %349 = vmatprep.subr.mxu0 0.0
          %350 = vmatpush1.msra.mxu0 0.0
          %351 = vmatprep.subr.mxu0 0.0
          %352 = vmatpush1.msra.mxu0 0.0
          %353 = vmatprep.subr.mxu0 0.0
          %354 = vmatpush1.msra.mxu0 0.0
          %355 = vmatprep.subr.mxu0 0.0
          %356 = vmatpush1.msra.mxu0 0.0
          %357 = vmatprep.subr.mxu0 0.0
          %358 = vmatpush1.msra.mxu0 0.0
          %359 = vmatprep.subr.mxu0 0.0
          %360 = vmatpush1.msra.mxu0 0.0
          %361 = vmatprep.subr.mxu0 0.0
          %362 = vmatpush1.msra.mxu0 0.0
          %363 = vmatprep.subr.mxu0 0.0
          %364 = vmatpush1.msra.mxu0 0.0
          %365 = vmatprep.subr.mxu0 0.0
          %366 = vmatpush1.msra.mxu0 0.0
          %367 = vmatprep.subr.mxu0 0.0
          %368 = vmatpush1.msra.mxu0 0.0
          %369 = vmatprep.subr.mxu0 0.0
          %370 = vmatpush1.msra.mxu0 0.0
          %371 = vmatprep.subr.mxu0 0.0
          %372 = vmatpush1.msra.mxu0 0.0
          %373 = vmatprep.subr.mxu0 0.0
          %374 = vmatpush1.msra.mxu0 0.0
          %375 = vmatprep.subr.mxu0 0.0
          %376 = vmatpush1.msra.mxu0 0.0
          %377 = vmatprep.mubr.f32.mxu0 0.0
          %378 = vmatmul.mubr.f32.gmra.mrb[0].mxu0 %v281
          %v379 = vpop.f32.mrb[0].mxu0
          %v380 = vadd.f32 0.0, %v379
          %v381 = vpop.f32.mrb[0].mxu0
          %382 = vmatprep.mubr.f32.mxu0 0.0
          %383 = vmatmul.mubr.f32.gmra.mrb[0].mxu0 %v282
          %v384 = vpop.f32.mrb[0].mxu0
          %v385 = vadd.f32 0.0, %v384
          %v386 = vpop.f32.mrb[0].mxu0
          %387 = vmatprep.mubr.f32.mxu0 0.0
          %388 = vmatmul.mubr.f32.gmra.mrb[0].mxu0 %v283
          %v389 = vpop.f32.mrb[0].mxu0
          %v390 = vadd.f32 0.0, %v389
          %v391 = vpop.f32.mrb[0].mxu0
          %392 = vmatprep.mubr.f32.mxu0 0.0
          %393 = vmatmul.mubr.f32.gmra.mrb[0].mxu0 %v284
          %v394 = vpop.f32.mrb[0].mxu0
          %v395 = vadd.f32 0.0, %v394
          %v396 = vpop.f32.mrb[0].mxu0
          %397 = vmatprep.mubr.f32.mxu0 0.0
          %398 = vmatmul.mubr.f32.gmra.mrb[0].mxu0 %v285
          %v399 = vpop.f32.mrb[0].mxu0
          %v400 = vadd.f32 0.0, %v399
          %v401 = vpop.f32.mrb[0].mxu0
          %402 = vmatprep.mubr.f32.mxu0 0.0
          %403 = vmatmul.mubr.f32.gmra.mrb[0].mxu0 %v286
          %v404 = vpop.f32.mrb[0].mxu0
          %v405 = vadd.f32 0.0, %v404
          %v406 = vpop.f32.mrb[0].mxu0
          %407 = vmatprep.mubr.f32.mxu0 0.0
          %408 = vmatmul.mubr.f32.gmra.mrb[0].mxu0 %v287
          %v409 = vpop.f32.mrb[0].mxu0
          %v410 = vadd.f32 0.0, %v409
          %v411 = vpop.f32.mrb[0].mxu0
          %412 = vmatprep.mubr.f32.mxu0 0.0
          %413 = vmatmul.mubr.f32.gmra.mrb[0].mxu0 %v288
          %v414 = vpop.f32.mrb[0].mxu0
          %v415 = vadd.f32 0.0, %v414
          %v416 = vpop.f32.mrb[0].mxu0
          %417 = vmatprep.mubr.f32.mxu0 0.0
          %418 = vmatmul.mubr.f32.gmra.mrb[0].mxu0 %v289
          %v419 = vpop.f32.mrb[0].mxu0
          %v420 = vadd.f32 0.0, %v419
          %v421 = vpop.f32.mrb[0].mxu0
          %422 = vmatprep.mubr.f32.mxu0 0.0
          %423 = vmatmul.mubr.f32.gmra.mrb[0].mxu0 %v290
          %v424 = vpop.f32.mrb[0].mxu0
          %v425 = vadd.f32 0.0, %v424
          %v426 = vpop.f32.mrb[0].mxu0
          %427 = vmatprep.mubr.f32.mxu0 0.0
          %428 = vmatmul.mubr.f32.gmra.mrb[0].mxu0 %v291
          %v429 = vpop.f32.mrb[0].mxu0
          %v430 = vadd.f32 0.0, %v429
          %v431 = vpop.f32.mrb[0].mxu0
          %432 = vmatprep.mubr.f32.mxu0 0.0
          %433 = vmatmul.mubr.f32.gmra.mrb[0].mxu0 %v292
          %v434 = vpop.f32.mrb[0].mxu0
          %v435 = vadd.f32 0.0, %v434
          %v436 = vpop.f32.mrb[0].mxu0
          %437 = vmatprep.mubr.f32.mxu0 0.0
          %438 = vmatmul.mubr.f32.gmra.mrb[0].mxu0 %v293
          %v439 = vpop.f32.mrb[0].mxu0
          %v440 = vadd.f32 0.0, %v439
          %v441 = vpop.f32.mrb[0].mxu0
          %442 = vmatprep.mubr.f32.mxu0 0.0
          %443 = vmatmul.mubr.f32.gmra.mrb[0].mxu0 %v294
          %v444 = vpop.f32.mrb[0].mxu0
          %v445 = vadd.f32 0.0, %v444
          %v446 = vpop.f32.mrb[0].mxu0
          %447 = vmatprep.mubr.f32.mxu0 0.0
          %448 = vmatmul.mubr.f32.gmra.mrb[0].mxu0 %v295
          %v449 = vpop.f32.mrb[0].mxu0
          %v450 = vadd.f32 0.0, %v449
          %v451 = vpop.f32.mrb[0].mxu0
          %452 = vmatprep.mubr.f32.mxu0 0.0
          %453 = vmatmul.mubr.f32.gmra.mrb[0].mxu0 %v296
          %v454 = vpop.f32.mrb[0].mxu0
          %v455 = vadd.f32 0.0, %v454
          %v456 = vpop.f32.mrb[0].mxu0
          %457 = vdwg.mxu0
          %458 = vst [vmem:[#allocation2] sm:$0xff] %v380
          %459 = vst [vmem:[#allocation2 + $0x8] sm:$0xff] %v385
          %460 = vst [vmem:[#allocation2 + $0x10] sm:$0xff] %v390
          %461 = vst [vmem:[#allocation2 + $0x18] sm:$0xff] %v395
          %462 = vst [vmem:[#allocation2 + $0x20] sm:$0xff] %v400
          %463 = vst [vmem:[#allocation2 + $0x28] sm:$0xff] %v405
          %464 = vst [vmem:[#allocation2 + $0x30] sm:$0xff] %v410
          %465 = vst [vmem:[#allocation2 + $0x38] sm:$0xff] %v415
          %466 = vst [vmem:[#allocation2 + $0x40] sm:$0xff] %v420
          %467 = vst [vmem:[#allocation2 + $0x48] sm:$0xff] %v425
          %468 = vst [vmem:[#allocation2 + $0x50] sm:$0xff] %v430
          %469 = vst [vmem:[#allocation2 + $0x58] sm:$0xff] %v435
          %470 = vst [vmem:[#allocation2 + $0x60] sm:$0xff] %v440
          %471 = vst [vmem:[#allocation2 + $0x68] sm:$0xff] %v445
          %472 = vst [vmem:[#allocation2 + $0x70] sm:$0xff] %v450
          %473 = vst [vmem:[#allocation2 + $0x78] sm:$0xff] %v455
        $region48: #{tpu_custom_call.1} parent=31 // pred_fallthru
          _
        %v474 = vld [vmem:[#allocation2] sm:$0xff]
        %v475 = vld [vmem:[#allocation2 + $0x8] sm:$0xff]
        %v476 = vld [vmem:[#allocation2 + $0x10] sm:$0xff]
        %v477 = vld [vmem:[#allocation2 + $0x18] sm:$0xff]
        %v478 = vld [vmem:[#allocation2 + $0x20] sm:$0xff]
        %v479 = vld [vmem:[#allocation2 + $0x28] sm:$0xff]
        %v480 = vld [vmem:[#allocation2 + $0x30] sm:$0xff]
        %v481 = vld [vmem:[#allocation2 + $0x38] sm:$0xff]
        %v482 = vld [vmem:[#allocation2 + $0x40] sm:$0xff]
        %v483 = vld [vmem:[#allocation2 + $0x48] sm:$0xff]
        %v484 = vld [vmem:[#allocation2 + $0x50] sm:$0xff]
        %v485 = vld [vmem:[#allocation2 + $0x58] sm:$0xff]
        %v486 = vld [vmem:[#allocation2 + $0x60] sm:$0xff]
        %v487 = vld [vmem:[#allocation2 + $0x68] sm:$0xff]
        %v488 = vld [vmem:[#allocation2 + $0x70] sm:$0xff]
        %v489 = vld [vmem:[#allocation2 + $0x78] sm:$0xff]
        %v490 = vld [vmem:[%s242] sm:$0xff]
        %v491 = vld [vmem:[%s242 + $0x8] sm:$0xff]
        %v492 = vld [vmem:[%s242 + $0x10] sm:$0xff]
        %v493 = vld [vmem:[%s242 + $0x18] sm:$0xff]
        %v494 = vld [vmem:[%s242 + $0x20] sm:$0xff]
        %v495 = vld [vmem:[%s242 + $0x28] sm:$0xff]
        %v496 = vld [vmem:[%s242 + $0x30] sm:$0xff]
        %v497 = vld [vmem:[%s242 + $0x38] sm:$0xff]
        %v498 = vld [vmem:[%s242 + $0x40] sm:$0xff]
        %v499 = vld [vmem:[%s242 + $0x48] sm:$0xff]
        %v500 = vld [vmem:[%s242 + $0x50] sm:$0xff]
        %v501 = vld [vmem:[%s242 + $0x58] sm:$0xff]
        %v502 = vld [vmem:[%s242 + $0x60] sm:$0xff]
        %v503 = vld [vmem:[%s242 + $0x68] sm:$0xff]
        %v504 = vld [vmem:[%s242 + $0x70] sm:$0xff]
        %v505 = vld [vmem:[%s242 + $0x78] sm:$0xff]
        %506 = vmatprep.subr.mxu0 0.0
        %507 = vmatpush1.xpose.msra.mxu0 %v490
        %508 = vmatprep.subr.mxu0 0.0
        %509 = vmatpush1.xpose.msra.mxu0 %v491
        %510 = vmatprep.subr.mxu0 0.0
        %511 = vmatpush1.xpose.msra.mxu0 %v492
        %512 = vmatprep.subr.mxu0 0.0
        %513 = vmatpush1.xpose.msra.mxu0 %v493
        %514 = vmatprep.subr.mxu0 0.0
        %515 = vmatpush1.xpose.msra.mxu0 %v494
        %516 = vmatprep.subr.mxu0 0.0
        %517 = vmatpush1.xpose.msra.mxu0 %v495
        %518 = vmatprep.subr.mxu0 0.0
        %519 = vmatpush1.xpose.msra.mxu0 %v496
        %520 = vmatprep.subr.mxu0 0.0
        %521 = vmatpush1.xpose.msra.mxu0 %v497
        %522 = vmatprep.subr.mxu0 0.0
        %523 = vmatpush1.xpose.msra.mxu0 %v498
        %524 = vmatprep.subr.mxu0 0.0
        %525 = vmatpush1.xpose.msra.mxu0 %v499
        %526 = vmatprep.subr.mxu0 0.0
        %527 = vmatpush1.xpose.msra.mxu0 %v500
        %528 = vmatprep.subr.mxu0 0.0
        %529 = vmatpush1.xpose.msra.mxu0 %v501
        %530 = vmatprep.subr.mxu0 0.0
        %531 = vmatpush1.xpose.msra.mxu0 %v502
        %532 = vmatprep.subr.mxu0 0.0
        %533 = vmatpush1.xpose.msra.mxu0 %v503
        %534 = vmatprep.subr.mxu0 0.0
        %535 = vmatpush1.xpose.msra.mxu0 %v504
        %536 = vmatprep.subr.mxu0 0.0
        %537 = vmatpush1.xpose.msra.mxu0 %v505
        %538 = vmatprep.subr.mxu0 0.0
        %539 = vmatpush1.xpose.msra.mxu0 0.0
        %540 = vmatprep.subr.mxu0 0.0
        %541 = vmatpush1.xpose.msra.mxu0 0.0
        %542 = vmatprep.subr.mxu0 0.0
        %543 = vmatpush1.xpose.msra.mxu0 0.0
        %544 = vmatprep.subr.mxu0 0.0
        %545 = vmatpush1.xpose.msra.mxu0 0.0
        %546 = vmatprep.subr.mxu0 0.0
        %547 = vmatpush1.xpose.msra.mxu0 0.0
        %548 = vmatprep.subr.mxu0 0.0
        %549 = vmatpush1.xpose.msra.mxu0 0.0
        %550 = vmatprep.subr.mxu0 0.0
        %551 = vmatpush1.xpose.msra.mxu0 0.0
        %552 = vmatprep.subr.mxu0 0.0
        %553 = vmatpush1.xpose.msra.mxu0 0.0
        %554 = vmatprep.subr.mxu0 0.0
        %555 = vmatpush1.xpose.msra.mxu0 0.0
        %556 = vmatprep.subr.mxu0 0.0
        %557 = vmatpush1.xpose.msra.mxu0 0.0
        %558 = vmatprep.subr.mxu0 0.0
        %559 = vmatpush1.xpose.msra.mxu0 0.0
        %560 = vmatprep.subr.mxu0 0.0
        %561 = vmatpush1.xpose.msra.mxu0 0.0
        %562 = vmatprep.subr.mxu0 0.0
        %563 = vmatpush1.xpose.msra.mxu0 0.0
        %564 = vmatprep.subr.mxu0 0.0
        %565 = vmatpush1.xpose.msra.mxu0 0.0
        %566 = vmatprep.subr.mxu0 0.0
        %567 = vmatpush1.xpose.msra.mxu0 0.0
        %568 = vmatprep.subr.mxu0 0.0
        %569 = vmatpush1.xpose.msra.mxu0 0.0
        %570 = vmatprep.mubr.f32.mxu0 0.0
        %571 = vmatmul.mubr.f32.gmra.mrb[0].mxu0 %v474
        %v572 = vpop.f32.mrb[0].mxu0
        %v573 = vadd.f32 0.0, %v572
        %v574 = vpop.f32.mrb[0].mxu0
        %575 = vmatprep.mubr.f32.mxu0 0.0
        %576 = vmatmul.mubr.f32.gmra.mrb[0].mxu0 %v475
        %v577 = vpop.f32.mrb[0].mxu0
        %v578 = vadd.f32 0.0, %v577
        %v579 = vpop.f32.mrb[0].mxu0
        %580 = vmatprep.mubr.f32.mxu0 0.0
        %581 = vmatmul.mubr.f32.gmra.mrb[0].mxu0 %v476
        %v582 = vpop.f32.mrb[0].mxu0
        %v583 = vadd.f32 0.0, %v582
        %v584 = vpop.f32.mrb[0].mxu0
        %585 = vmatprep.mubr.f32.mxu0 0.0
        %586 = vmatmul.mubr.f32.gmra.mrb[0].mxu0 %v477
        %v587 = vpop.f32.mrb[0].mxu0
        %v588 = vadd.f32 0.0, %v587
        %v589 = vpop.f32.mrb[0].mxu0
        %590 = vmatprep.mubr.f32.mxu0 0.0
        %591 = vmatmul.mubr.f32.gmra.mrb[0].mxu0 %v478
        %v592 = vpop.f32.mrb[0].mxu0
        %v593 = vadd.f32 0.0, %v592
        %v594 = vpop.f32.mrb[0].mxu0
        %595 = vmatprep.mubr.f32.mxu0 0.0
        %596 = vmatmul.mubr.f32.gmra.mrb[0].mxu0 %v479
        %v597 = vpop.f32.mrb[0].mxu0
        %v598 = vadd.f32 0.0, %v597
        %v599 = vpop.f32.mrb[0].mxu0
        %600 = vmatprep.mubr.f32.mxu0 0.0
        %601 = vmatmul.mubr.f32.gmra.mrb[0].mxu0 %v480
        %v602 = vpop.f32.mrb[0].mxu0
        %v603 = vadd.f32 0.0, %v602
        %v604 = vpop.f32.mrb[0].mxu0
        %605 = vmatprep.mubr.f32.mxu0 0.0
        %606 = vmatmul.mubr.f32.gmra.mrb[0].mxu0 %v481
        %v607 = vpop.f32.mrb[0].mxu0
        %v608 = vadd.f32 0.0, %v607
        %v609 = vpop.f32.mrb[0].mxu0
        %610 = vmatprep.mubr.f32.mxu0 0.0
        %611 = vmatmul.mubr.f32.gmra.mrb[0].mxu0 %v482
        %v612 = vpop.f32.mrb[0].mxu0
        %v613 = vadd.f32 0.0, %v612
        %v614 = vpop.f32.mrb[0].mxu0
        %615 = vmatprep.mubr.f32.mxu0 0.0
        %616 = vmatmul.mubr.f32.gmra.mrb[0].mxu0 %v483
        %v617 = vpop.f32.mrb[0].mxu0
        %v618 = vadd.f32 0.0, %v617
        %v619 = vpop.f32.mrb[0].mxu0
        %620 = vmatprep.mubr.f32.mxu0 0.0
        %621 = vmatmul.mubr.f32.gmra.mrb[0].mxu0 %v484
        %v622 = vpop.f32.mrb[0].mxu0
        %v623 = vadd.f32 0.0, %v622
        %v624 = vpop.f32.mrb[0].mxu0
        %625 = vmatprep.mubr.f32.mxu0 0.0
        %626 = vmatmul.mubr.f32.gmra.mrb[0].mxu0 %v485
        %v627 = vpop.f32.mrb[0].mxu0
        %v628 = vadd.f32 0.0, %v627
        %v629 = vpop.f32.mrb[0].mxu0
        %630 = vmatprep.mubr.f32.mxu0 0.0
        %631 = vmatmul.mubr.f32.gmra.mrb[0].mxu0 %v486
        %v632 = vpop.f32.mrb[0].mxu0
        %v633 = vadd.f32 0.0, %v632
        %v634 = vpop.f32.mrb[0].mxu0
        %635 = vmatprep.mubr.f32.mxu0 0.0
        %636 = vmatmul.mubr.f32.gmra.mrb[0].mxu0 %v487
        %v637 = vpop.f32.mrb[0].mxu0
        %v638 = vadd.f32 0.0, %v637
        %v639 = vpop.f32.mrb[0].mxu0
        %640 = vmatprep.mubr.f32.mxu0 0.0
        %641 = vmatmul.mubr.f32.gmra.mrb[0].mxu0 %v488
        %v642 = vpop.f32.mrb[0].mxu0
        %v643 = vadd.f32 0.0, %v642
        %v644 = vpop.f32.mrb[0].mxu0
        %645 = vmatprep.mubr.f32.mxu0 0.0
        %646 = vmatmul.mubr.f32.gmra.mrb[0].mxu0 %v489
        %v647 = vpop.f32.mrb[0].mxu0
        %v648 = vadd.f32 0.0, %v647
        %v649 = vpop.f32.mrb[0].mxu0
        %650 = vdwg.mxu0
        %651 = vst [vmem:[%s273] sm:$0xff] %v573
        %652 = vst [vmem:[%s273 + $0x8] sm:$0xff] %v578
        %653 = vst [vmem:[%s273 + $0x10] sm:$0xff] %v583
        %654 = vst [vmem:[%s273 + $0x18] sm:$0xff] %v588
        %655 = vst [vmem:[%s273 + $0x20] sm:$0xff] %v593
        %656 = vst [vmem:[%s273 + $0x28] sm:$0xff] %v598
        %657 = vst [vmem:[%s273 + $0x30] sm:$0xff] %v603
        %658 = vst [vmem:[%s273 + $0x38] sm:$0xff] %v608
        %659 = vst [vmem:[%s273 + $0x40] sm:$0xff] %v613
        %660 = vst [vmem:[%s273 + $0x48] sm:$0xff] %v618
        %661 = vst [vmem:[%s273 + $0x50] sm:$0xff] %v623
        %662 = vst [vmem:[%s273 + $0x58] sm:$0xff] %v628
        %663 = vst [vmem:[%s273 + $0x60] sm:$0xff] %v633
        %664 = vst [vmem:[%s273 + $0x68] sm:$0xff] %v638
        %665 = vst [vmem:[%s273 + $0x70] sm:$0xff] %v643
        %666 = vst [vmem:[%s273 + $0x78] sm:$0xff] %v648
        %s667 = sand.u32 %s131, 1
        %s668 = scalar_lea.sflag [#allocation5], %s667
        %s669 = sand.u32 %s131, 1
        %s670 = smul.addr %s669, 128
        %s671 = scalar_lea.vmem [#allocation9], %s670
        // Predicated region
        $region49: #{tpu_custom_call.1} parent=31 // pred_check
          %p672 = pneg %p141
        $region50: #{tpu_custom_call.1} parent=31 // pred_check_branch
          %674 = sbr.rel (%p672) target = $region52
        $region51: #{tpu_custom_call.1} parent=31 // pred_region
          %s675 = smul.u32 16, %s29
          %s677 = ssub.s32 2048, 2048
          %678 = vsyncadd %s668, %s677
          %s679 = sadd.s32 %s30, %s675
          %s680 = smul.addr %s28, 16
          %s681 = sadd.s32 %s679, %s680
          %s682 = smul.addr %s681, 128
          %s683 = scalar_lea.hbm %s3, %s682
          %s684 = sshll.u32 %s671, 4
          %s685 = int_to_ptr.vmem [resolvable:$true] %s684
          %690 = dma.vmem_to_hbm [thread:$0]  %s685, 2048, %s683, %s668, 128, 128, 8
        $region52: #{tpu_custom_call.1} parent=31 // pred_fallthru
          _
      $region32: #{tpu_custom_call.1} parent=5 // pred_fallthru
        _
      %p691 = scmp.le.s32.totalorder 2, %s18
      // Predicated region
      $region53: #{tpu_custom_call.1} parent=5 // pred_check
        %p692 = pneg %p691
      $region54: #{tpu_custom_call.1} parent=5 // pred_check_branch
        %694 = sbr.rel (%p692) target = $region56
      $region55: #{tpu_custom_call.1} parent=5 // pred_region
        %s695 = ssub.s32 %s18, 2
        // Predicated region
        $region57: #{tpu_custom_call.1} parent=55 // pred_check
          %p696 = pneg %p147
        $region58: #{tpu_custom_call.1} parent=55 // pred_check_branch
          %698 = sbr.rel (%p696) target = $region60
        $region59: #{tpu_custom_call.1} parent=55 // pred_region
          %s699 = sand.u32 %s132, 1
          %s700 = scalar_lea.sflag [#allocation5], %s699
          %s701 = sand.u32 %s132, 1
          %s702 = smul.addr %s701, 128
          %s703 = scalar_lea.vmem [#allocation9], %s702
          %704 = dma.done %s700, 2048
        $region60: #{tpu_custom_call.1} parent=55 // pred_fallthru
          _
      $region56: #{tpu_custom_call.1} parent=5 // pred_fallthru
        _
    $region6: #{tpu_custom_call.1} parent=1 // loop_footer
      %s22 = sadd.s32 1, %s18
    $region7: #{tpu_custom_call.1} parent=1 // loop_footer_branch
      %17 = sbr.rel target = $region3
    $region8: #{tpu_custom_call.1} parent=1 // loop_exit
      _
    %705 = vsyncpa [#allocation4], 1
    %s706 = scalar_lea.sflag [#allocation4], 1
    %707 = vsyncpa %s706, 1
    %708 = vsyncpa [#allocation7], 1
    %s709 = scalar_lea.sflag [#allocation7], 1
    %710 = vsyncpa %s709, 1
    %711 = vsyncpa [#allocation5], 1
    %s712 = scalar_lea.sflag [#allocation5], 1
    %713 = vsyncpa %s712, 1

</llo_original>
